<compile_context>
chip_gen: v5e
topology: v5e:2x2
jax: 0.10.0
libtpu: 0.0.40
codegen_flags: <defaults>
</compile_context>

<pallas_src>
import math

import jax
import jax.numpy as jnp
from jax.experimental import pallas as pl
from jax.experimental.pallas import tpu as pltpu


def _tanh_kernel(x_ref, o_ref):
    # One EUP transcendental per element, hidden under the HBM stream.
    # Upcast to f32 (VPU casts are free filler; v5e lacks bf16 EUP paths and
    # integer inputs must promote like torch.tanh).
    o_ref[...] = jnp.tanh(x_ref[...].astype(jnp.float32)).astype(o_ref.dtype)


def _round_up(a, b):
    return ((a + b - 1) // b) * b


def _pick_width(n):
    # Largest lane-dense width that divides n -> copy-free reshape (bitcast).
    for w in (1024, 512, 256, 128):
        if n % w == 0:
            return w, True
    return 512, False  # genuinely ragged total size -> pad path


def tanh_op_node_forward(x, *, target_block_bytes=8 * 1024 * 1024):
    """Pallas TanHOperationNode.forward: elementwise tanh of the child value."""
    # TODO(synk): evaluating the child subtree (pull_up_child_value) belongs to
    # the tree interpreter; this kernel implements the node's own op (tanh).
    orig_shape = x.shape
    n = math.prod(orig_shape)

    # torch.tanh promotes integral/bool inputs to floating point.
    out_dtype = x.dtype if jnp.issubdtype(x.dtype, jnp.floating) else jnp.float32
    if n == 0:
        return x.astype(out_dtype)

    in_itemsize = jnp.dtype(x.dtype).itemsize
    out_itemsize = jnp.dtype(out_dtype).itemsize
    size_itemsize = max(in_itemsize, out_itemsize)

    W, copy_free = _pick_width(n)
    total_rows = pl.cdiv(n, W)            # == n // W on the copy-free path
    padded_n = total_rows * W

    # Sublane packing granule: 8 rows (4B), 16 (2B), 32 (1B dtypes).
    granule = max(8, 32 // min(in_itemsize, out_itemsize))

    slab_bytes = total_rows * W * size_itemsize
    rows_per_block = max(
        granule, (target_block_bytes // (W * size_itemsize)) // granule * granule
    )
    if total_rows <= rows_per_block:
        if slab_bytes <= 512 * 1024:
            # Tiny operand: single block == full array (always a legal block).
            rows_per_block = total_rows
        else:
            # Mid-sized: keep >=2 blocks so DMA-in / compute / DMA-out overlap
            # (and v7x's second TensorCore gets row-blocks).
            want_blocks = 4 if slab_bytes > (2 << 20) else 2
            rows_per_block = max(
                granule, _round_up(pl.cdiv(total_rows, want_blocks), granule)
            )
    num_blocks = pl.cdiv(total_rows, rows_per_block)

    if copy_free:
        slab = x.reshape(total_rows, W)   # free bitcast (row-major contiguous)
    else:
        # Ragged total size: pad at most W-1 elements. The pad / post-slice are
        # an extra HBM pass, but only truly ragged shapes ever hit this branch.
        flat = jnp.ravel(x)
        flat = jnp.pad(flat, (0, padded_n - n))
        slab = flat.reshape(total_rows, W)

    # Double-buffered in+out blocks plus headroom; capped below v7x's 64 MiB
    # physical VMEM, 32 MiB floor elsewhere.
    in_block = rows_per_block * W * in_itemsize
    out_block = rows_per_block * W * out_itemsize
    vmem_limit = int(
        min(56 << 20, max(32 << 20, 2 * (in_block + out_block) + (4 << 20)))
    )

    out_slab = pl.pallas_call(
        _tanh_kernel,
        out_shape=jax.ShapeDtypeStruct((total_rows, W), out_dtype),
        grid=(num_blocks,),
        in_specs=[pl.BlockSpec((rows_per_block, W), lambda i: (i, 0))],
        out_specs=pl.BlockSpec((rows_per_block, W), lambda i: (i, 0)),
        compiler_params=pltpu.CompilerParams(
            # TODO(synk): on v7x, if a profile shows one TensorCore idle,
            # switch this axis to pltpu.CORE_PARALLEL.
            dimension_semantics=("parallel",),
            vmem_limit_bytes=vmem_limit,
        ),
        cost_estimate=pl.CostEstimate(
            flops=0,
            transcendentals=padded_n,
            bytes_accessed=padded_n * (in_itemsize + out_itemsize),
        ),
    )(slab)

    if copy_free:
        return out_slab.reshape(orig_shape)
    return out_slab.reshape(-1)[:n].reshape(orig_shape)


if __name__ == "__main__":
    key = jax.random.PRNGKey(0)
    k1, k2, k3, k4 = jax.random.split(key, 4)

    # Batch tensor the node's forward sees; numel % 128 == 0 -> copy-free path.
    x = jax.random.normal(k1, (2, 4, 16, 16), dtype=jnp.float32)
    out = jax.block_until_ready(tanh_op_node_forward(x))
    ref = jnp.tanh(x)
    assert out.shape == ref.shape and out.dtype == ref.dtype
    assert jnp.allclose(out, ref, atol=1e-6, rtol=1e-6)

    # Ragged total size -> pad fallback path.
    y = jax.random.normal(k2, (5, 37), dtype=jnp.float32)
    out2 = jax.block_until_ready(tanh_op_node_forward(y))
    assert out2.shape == y.shape and out2.dtype == y.dtype
    assert jnp.allclose(out2, jnp.tanh(y), atol=1e-6, rtol=1e-6)

    # Mid-sized operand -> multi-block pipelined grid with a partial last block.
    z = jax.random.normal(k3, (520, 512), dtype=jnp.float32)
    out3 = jax.block_until_ready(tanh_op_node_forward(z))
    assert jnp.allclose(out3, jnp.tanh(z), atol=1e-6, rtol=1e-6)

    # Integer input promotes to float32 (torch.tanh semantics).
    w = jax.random.randint(k4, (8, 128), -3, 4, dtype=jnp.int32)
    out4 = jax.block_until_ready(tanh_op_node_forward(w))
    assert out4.dtype == jnp.float32
    assert jnp.allclose(out4, jnp.tanh(w.astype(jnp.float32)), atol=1e-6, rtol=1e-6)

    print("KERNEL_OK")
</pallas_src>

<mosaic_0001>
module attributes {stable_mosaic.version = 11 : i64} {
  func.func @_tanh_kernel(%arg0: i32, %arg1: memref<2x1024xf32, #tpu.memory_space<vmem>>, %arg2: memref<2x1024xf32, #tpu.memory_space<vmem>>) attributes {dimension_semantics = [#tpu.dimension_semantics<parallel>], iteration_bounds = array<i64: 1>, scalar_prefetch = 0 : i64, scratch_operands = 0 : i64, tpu.core_type = #tpu.core_type<tc>, window_params = [{transform_indices = @transform_0, window_bounds = array<i64: 2, 1024>}, {transform_indices = @transform_1, window_bounds = array<i64: 2, 1024>}]} {
    %c0 = arith.constant 0 : index
    %c0_0 = arith.constant 0 : index
    %0 = vector.load %arg1[%c0, %c0_0] : memref<2x1024xf32, #tpu.memory_space<vmem>>, vector<2x1024xf32>
    %1 = math.tanh %0 : vector<2x1024xf32>
    %c0_1 = arith.constant 0 : index
    %c0_2 = arith.constant 0 : index
    %2 = vector.load %arg2[%c0_1, %c0_2] : memref<2x1024xf32, #tpu.memory_space<vmem>>, vector<2x1024xf32>
    tpu.vector_store %arg2[%c0_1, %c0_2], %1 {strides = array<i32>} : memref<2x1024xf32, #tpu.memory_space<vmem>>, vector<2x1024xf32>,
    return
  }
  func.func @transform_0(%arg0: i32) -> (i32, i32) {
    %c0_i32 = arith.constant 0 : i32
    %c0_i32_0 = arith.constant 0 : i32
    return %arg0, %c0_i32 : i32, i32
  }
  func.func @transform_1(%arg0: i32) -> (i32, i32) {
    %c0_i32 = arith.constant 0 : i32
    %c0_i32_0 = arith.constant 0 : i32
    return %arg0, %c0_i32 : i32, i32
  }
}

</mosaic_0001>

<llo_original>
// kernel: tpu_custom_call.1
$region0: #{tpu_custom_call.1}
  #allocation0 [shape = 'u32[]', space=smem, size = 0x4, offset = 0x4, fixed_abs, tag = 'smem constant byte address 0x4 - core index']
  #allocation1 [shape = 'u32[72,128]{1,0:T(1,128)}', space=vmem, size = 0x9000, scoped, tag = 'internal scratch']
  %s0 = inlined_call_operand.hbm [shape: f32[2,1024], index: 0, kind: input, shape index: {}]
  %s1 = inlined_call_operand.hbm [shape: f32[2,1024], index: 1, kind: output, shape index: {}]
  %s2 = sld [smem:[#allocation0]]
  $region18: #{tpu_custom_call.1} parent=0
    _
  %s4 = ssub.s32 1, %s2
  %s5 = scalar_select 0, %s4, %s2
  $region1: #{tpu_custom_call.1} parent=0
    #allocation2 [shape = 'u8[8192]{0}', space=vmem, size = 0x2000, scoped, tag = 'input window, operand 0, single buffered']
    #allocation3 [shape = 's32[1]{0}', space=sflag, size = 0x4, scoped, tag = 'scoped memory for tpu_custom_call.1']
    #allocation4 [shape = 's32[1]{0}', space=sflag, size = 0x4, scoped, tag = 'scoped memory for tpu_custom_call.1']
    #allocation5 [shape = 'u8[8192]{0}', space=vmem, size = 0x2000, scoped, tag = 'output window, operand 0, single buffered']
    %6 = vsyncpa [#allocation3], 0
    %7 = vsyncpa [#allocation4], 0
    // Predicated region
    $region2: #{tpu_custom_call.1} parent=1 // pred_check
      _
    $region3: #{tpu_custom_call.1} parent=1 // pred_check_branch
      %9 = sbr.rel (0) target = $region5
    $region4: #{tpu_custom_call.1} parent=1 // pred_region
      %11 = vsyncadd [#allocation3], 0
      %s13 = sshll.u32 %s0, 4
      %s14 = int_to_ptr.hbm [resolvable:$true] %s13
      %s15 = sshll.u32 [#allocation2], 4
      %s16 = int_to_ptr.vmem [resolvable:$true] %s15
      %18 = dma.hbm_to_vmem [thread:$0]  %s14, 256, %s16, [#allocation3]
    $region5: #{tpu_custom_call.1} parent=1 // pred_fallthru
      _
    // Predicated region
    $region6: #{tpu_custom_call.1} parent=1 // pred_check
      _
    $region7: #{tpu_custom_call.1} parent=1 // pred_check_branch
      %20 = sbr.rel (0) target = $region9
    $region8: #{tpu_custom_call.1} parent=1 // pred_region
      %22 = dma.done [#allocation3], 256
    $region9: #{tpu_custom_call.1} parent=1 // pred_fallthru
      _
    %v23 = vld [vmem:[#allocation2] sm:$0xff]
    %v24 = vld [vmem:[#allocation2 + $0x8] sm:$0xff]
    %v25 = vtanh.pop %v23
    %v26 = vtanh.pop %v24
    %27 = vst [vmem:[#allocation5] sm:$0xff] %v25
    %28 = vst [vmem:[#allocation5 + $0x8] sm:$0xff] %v26
    // Predicated region
    $region10: #{tpu_custom_call.1} parent=1 // pred_check
      _
    $region11: #{tpu_custom_call.1} parent=1 // pred_check_branch
      %30 = sbr.rel (0) target = $region13
    $region12: #{tpu_custom_call.1} parent=1 // pred_region
      %32 = vsyncadd [#allocation4], 0
      %s34 = sshll.u32 [#allocation5], 4
      %s35 = int_to_ptr.vmem [resolvable:$true] %s34
      %s36 = sshll.u32 %s1, 4
      %s37 = int_to_ptr.hbm [resolvable:$true] %s36
      %39 = dma.vmem_to_hbm [thread:$0]  %s35, 256, %s37, [#allocation4]
    $region13: #{tpu_custom_call.1} parent=1 // pred_fallthru
      _
    // Predicated region
    $region14: #{tpu_custom_call.1} parent=1 // pred_check
      _
    $region15: #{tpu_custom_call.1} parent=1 // pred_check_branch
      %41 = sbr.rel (0) target = $region17
    $region16: #{tpu_custom_call.1} parent=1 // pred_region
      %43 = dma.done [#allocation4], 256
    $region17: #{tpu_custom_call.1} parent=1 // pred_fallthru
      _
    %44 = vsyncpa [#allocation3], 1
    %45 = vsyncpa [#allocation4], 1

</llo_original>
